<compile_context>
chip_gen: v7x
topology: tpu7x:2x2x1
jax: 0.10.0
libtpu: 0.0.40
codegen_flags: <defaults>
</compile_context>

<pallas_src>
import numpy as np
import jax
import jax.numpy as jnp
from jax.experimental import pallas as pl
from jax.experimental.pallas import tpu as pltpu


LANES = 512          # lane-dense last dim (multiple of 128)
TR_TARGET = 512      # row tile: (512, 512) f32 = 1 MiB per slab


def normalize_tuple(t):
    v = np.asarray(t, dtype=np.float64)
    return tuple((v / np.linalg.norm(v)).tolist())


def _cubic_aniso_kernel(kc, axes_mat):
    """Kernel factory.  kc and the 3x3 axes matrix are baked in as constants."""
    kc = float(kc)
    axes = [tuple(float(c) for c in row) for row in np.asarray(axes_mat, dtype=np.float64)]

    def kernel(spin_ref, geo_ref, out_ref):
        # spin_ref: (3, TR, LANES) in VMEM
        # geo_ref : (TR, LANES) in VMEM
        # out_ref : (TR, LANES) in VMEM
        s0 = spin_ref[0].astype(jnp.float32)
        s1 = spin_ref[1].astype(jnp.float32)
        s2 = spin_ref[2].astype(jnp.float32)
        acc = None
        for a0, a1, a2 in axes:  # static unrolled loop over the 3 anisotropy axes
            mh = a0 * s0 + a1 * s1 + a2 * s2
            mh2 = mh * mh
            term = mh2 * mh2
            acc = term if acc is None else acc + term
        out_ref[...] = ((-kc) * acc * geo_ref[...].astype(jnp.float32)).astype(out_ref.dtype)

    return kernel


class CubicAnistropyPallas:
    """JAX/Pallas port of maglab CubicAnistropy (forward pass)."""

    def __init__(self, kc, axis1, axis2, normalize=True):
        if normalize:
            axis1 = normalize_tuple(axis1)
            axis2 = normalize_tuple(axis2)
        self.axes = [axis1, axis2]
        # NOTE: axis3 = cross(axis1, axis2) is NOT re-normalized, matching PyTorch.
        axis3 = tuple(np.cross(np.array(axis1), np.array(axis2)).tolist())
        self.kc = float(kc)
        self.axes_np = np.stack(
            [np.array(axis1), np.array(axis2), np.array(axis3)]
        ).astype(np.float64)
        self.axes_mat = jnp.asarray(self.axes_np, dtype=jnp.float32)  # for the reference
        self._kernel = _cubic_aniso_kernel(self.kc, self.axes_np)

    def __call__(self, spin, geo, Ms=None):
        # spin: (3, X, Y, Z), geo: (X, Y, Z).  Ms is unused (as in PyTorch forward).
        assert spin.shape[0] == 3
        X, Y, Z = spin.shape[1:]
        n = X * Y * Z

        # --- choose tiling: lane-dense (R, LANES) slab, big row tiles --------
        rows_needed = -(-n // LANES)                       # ceil(n / LANES)
        if rows_needed <= TR_TARGET:
            tr = max(8, ((rows_needed + 7) // 8) * 8)      # round up to multiple of 8
            R = tr
        else:
            tr = TR_TARGET
            R = ((rows_needed + tr - 1) // tr) * tr        # pad rows to multiple of tr
        grid = (R // tr,)
        n_pad = R * LANES

        # --- flatten + zero-pad + reshape (pad cells have geo==0 -> E==0) ----
        spin_flat = spin.reshape(3, n)
        geo_flat = geo.reshape(n)
        if n_pad != n:
            spin_flat = jnp.pad(spin_flat, ((0, 0), (0, n_pad - n)))
            geo_flat = jnp.pad(geo_flat, (0, n_pad - n))
        spin2d = spin_flat.reshape(3, R, LANES)
        geo2d = geo_flat.reshape(R, LANES)

        out2d = pl.pallas_call(
            self._kernel,
            out_shape=jax.ShapeDtypeStruct((R, LANES), jnp.float32),
            grid_spec=pl.GridSpec(
                grid=grid,
                in_specs=[
                    pl.BlockSpec((3, tr, LANES), lambda i: (0, i, 0)),
                    pl.BlockSpec((tr, LANES), lambda i: (i, 0)),
                ],
                out_specs=pl.BlockSpec((tr, LANES), lambda i: (i, 0)),
            ),
            compiler_params=pltpu.CompilerParams(
                dimension_semantics=("parallel",),
                vmem_limit_bytes=32 * 1024 * 1024,
            ),
        )(spin2d, geo2d)

        return out2d.reshape(n_pad)[:n].reshape(X, Y, Z)


def _reference(spin, geo, axes_mat, kc):
    # Pure-JAX reference matching the PyTorch forward.
    ax = axes_mat.reshape(3, 3, 1, 1, 1)
    mh = jnp.sum(spin[None, :, :, :, :] * ax, axis=1)  # (3, X, Y, Z)
    return -kc * jnp.sum(mh ** 4, axis=0) * geo


if __name__ == "__main__":
    key = jax.random.PRNGKey(0)
    k1, k2 = jax.random.split(key)

    X, Y, Z = 16, 16, 8  # small spatial volume (n = 2048)

    # deterministic inputs: random spin directions (normalized), binary-ish geo
    spin = jax.random.normal(k1, (3, X, Y, Z), dtype=jnp.float32)
    spin = spin / jnp.linalg.norm(spin, axis=0, keepdims=True)
    geo = (jax.random.uniform(k2, (X, Y, Z)) > 0.2).astype(jnp.float32)
    Ms = jnp.float32(8e5)  # unused by the forward, kept for signature parity

    mod = CubicAnistropyPallas(kc=1.0e4, axis1=(1.0, 1.0, 0.0), axis2=(-1.0, 1.0, 0.0))

    E = mod(spin, geo, Ms)
    E = jax.block_until_ready(E)

    E_ref = _reference(spin, geo, mod.axes_mat, mod.kc)
    assert E.shape == (X, Y, Z)
    np.testing.assert_allclose(np.asarray(E), np.asarray(E_ref), rtol=1e-5, atol=1e-3)

    print("KERNEL_OK")
</pallas_src>

<mosaic_0001>
module attributes {stable_mosaic.version = 11 : i64} {
  func.func @kernel(%arg0: i32, %arg1: memref<3x8x512xf32, #tpu.memory_space<vmem>>, %arg2: memref<8x512xf32, #tpu.memory_space<vmem>>, %arg3: memref<8x512xf32, #tpu.memory_space<vmem>>) attributes {dimension_semantics = [#tpu.dimension_semantics<parallel>], iteration_bounds = array<i64: 1>, scalar_prefetch = 0 : i64, scratch_operands = 0 : i64, tpu.core_type = #tpu.core_type<tc>, window_params = [{transform_indices = @transform_0, window_bounds = array<i64: 3, 8, 512>}, {transform_indices = @transform_1, window_bounds = array<i64: 8, 512>}, {transform_indices = @transform_2, window_bounds = array<i64: 8, 512>}]} {
    %c0 = arith.constant 0 : index
    %c0_0 = arith.constant 0 : index
    %c0_1 = arith.constant 0 : index
    %0 = vector.load %arg1[%c0, %c0_0, %c0_1] : memref<3x8x512xf32, #tpu.memory_space<vmem>>, vector<1x8x512xf32>
    %1 = vector.shape_cast %0 : vector<1x8x512xf32> to vector<8x512xf32>
    %c1 = arith.constant 1 : index
    %c0_2 = arith.constant 0 : index
    %c0_3 = arith.constant 0 : index
    %2 = vector.load %arg1[%c1, %c0_2, %c0_3] : memref<3x8x512xf32, #tpu.memory_space<vmem>>, vector<1x8x512xf32>
    %3 = vector.shape_cast %2 : vector<1x8x512xf32> to vector<8x512xf32>
    %c2 = arith.constant 2 : index
    %c0_4 = arith.constant 0 : index
    %c0_5 = arith.constant 0 : index
    %4 = vector.load %arg1[%c2, %c0_4, %c0_5] : memref<3x8x512xf32, #tpu.memory_space<vmem>>, vector<1x8x512xf32>
    %5 = vector.shape_cast %4 : vector<1x8x512xf32> to vector<8x512xf32>
    %cst = arith.constant 0.707106769 : f32
    %6 = vector.broadcast %cst : f32 to vector<8x512xf32>
    %7 = arith.mulf %6, %1 : vector<8x512xf32>
    %cst_6 = arith.constant 0.707106769 : f32
    %8 = vector.broadcast %cst_6 : f32 to vector<8x512xf32>
    %9 = arith.mulf %8, %3 : vector<8x512xf32>
    %10 = arith.addf %7, %9 : vector<8x512xf32>
    %cst_7 = arith.constant 0.000000e+00 : f32
    %11 = vector.broadcast %cst_7 : f32 to vector<8x512xf32>
    %12 = arith.mulf %11, %5 : vector<8x512xf32>
    %13 = arith.addf %10, %12 : vector<8x512xf32>
    %14 = arith.mulf %13, %13 : vector<8x512xf32>
    %15 = arith.mulf %14, %14 : vector<8x512xf32>
    %cst_8 = arith.constant -0.707106769 : f32
    %16 = vector.broadcast %cst_8 : f32 to vector<8x512xf32>
    %17 = arith.mulf %16, %1 : vector<8x512xf32>
    %cst_9 = arith.constant 0.707106769 : f32
    %18 = vector.broadcast %cst_9 : f32 to vector<8x512xf32>
    %19 = arith.mulf %18, %3 : vector<8x512xf32>
    %20 = arith.addf %17, %19 : vector<8x512xf32>
    %cst_10 = arith.constant 0.000000e+00 : f32
    %21 = vector.broadcast %cst_10 : f32 to vector<8x512xf32>
    %22 = arith.mulf %21, %5 : vector<8x512xf32>
    %23 = arith.addf %20, %22 : vector<8x512xf32>
    %24 = arith.mulf %23, %23 : vector<8x512xf32>
    %25 = arith.mulf %24, %24 : vector<8x512xf32>
    %26 = arith.addf %15, %25 : vector<8x512xf32>
    %cst_11 = arith.constant 0.000000e+00 : f32
    %27 = vector.broadcast %cst_11 : f32 to vector<8x512xf32>
    %28 = arith.mulf %27, %1 : vector<8x512xf32>
    %cst_12 = arith.constant -0.000000e+00 : f32
    %29 = vector.broadcast %cst_12 : f32 to vector<8x512xf32>
    %30 = arith.mulf %29, %3 : vector<8x512xf32>
    %31 = arith.addf %28, %30 : vector<8x512xf32>
    %cst_13 = arith.constant 1.000000e+00 : f32
    %32 = vector.broadcast %cst_13 : f32 to vector<8x512xf32>
    %33 = arith.mulf %32, %5 : vector<8x512xf32>
    %34 = arith.addf %31, %33 : vector<8x512xf32>
    %35 = arith.mulf %34, %34 : vector<8x512xf32>
    %36 = arith.mulf %35, %35 : vector<8x512xf32>
    %37 = arith.addf %26, %36 : vector<8x512xf32>
    %cst_14 = arith.constant -1.000000e+04 : f32
    %38 = vector.broadcast %cst_14 : f32 to vector<8x512xf32>
    %39 = arith.mulf %38, %37 : vector<8x512xf32>
    %c0_15 = arith.constant 0 : index
    %c0_16 = arith.constant 0 : index
    %40 = vector.load %arg2[%c0_15, %c0_16] : memref<8x512xf32, #tpu.memory_space<vmem>>, vector<8x512xf32>
    %41 = arith.mulf %39, %40 : vector<8x512xf32>
    %c0_17 = arith.constant 0 : index
    %c0_18 = arith.constant 0 : index
    %42 = vector.load %arg3[%c0_17, %c0_18] : memref<8x512xf32, #tpu.memory_space<vmem>>, vector<8x512xf32>
    tpu.vector_store %arg3[%c0_17, %c0_18], %41 {strides = array<i32>} : memref<8x512xf32, #tpu.memory_space<vmem>>, vector<8x512xf32>,
    return
  }
  func.func @transform_0(%arg0: i32) -> (i32, i32, i32) {
    %c0_i32 = arith.constant 0 : i32
    %c0_i32_0 = arith.constant 0 : i32
    %c0_i32_1 = arith.constant 0 : i32
    return %c0_i32, %arg0, %c0_i32_0 : i32, i32, i32
  }
  func.func @transform_1(%arg0: i32) -> (i32, i32) {
    %c0_i32 = arith.constant 0 : i32
    %c0_i32_0 = arith.constant 0 : i32
    return %arg0, %c0_i32 : i32, i32
  }
  func.func @transform_2(%arg0: i32) -> (i32, i32) {
    %c0_i32 = arith.constant 0 : i32
    %c0_i32_0 = arith.constant 0 : i32
    return %arg0, %c0_i32 : i32, i32
  }
}

</mosaic_0001>

<llo_original>
// kernel: tpu_custom_call.1
$region0: #{tpu_custom_call.1}
  #allocation0 [shape = 'u32[]', space=smem, size = 0x4, offset = 0x4, fixed_abs, tag = 'smem constant byte address 0x4 - core index']
  #allocation1 [shape = 'u32[144,128]{1,0:T(1,128)}', space=vmem, size = 0x12000, scoped, tag = 'internal scratch']
  %s0 = inlined_call_operand.hbm [shape: f32[3,8,512], index: 0, kind: input, shape index: {}]
  %s1 = inlined_call_operand.hbm [shape: f32[8,512], index: 1, kind: input, shape index: {}]
  %s2 = inlined_call_operand.hbm [shape: f32[8,512], index: 2, kind: output, shape index: {}]
  %s3 = sld [smem:[#allocation0]]
  $region26: #{tpu_custom_call.1} parent=0
    _
  %s5 = ssub.s32 1, %s3
  %s6 = scalar_select 0, %s5, %s3
  $region1: #{tpu_custom_call.1} parent=0
    #allocation2 [shape = 'u8[49152]{0}', space=vmem, size = 0xc000, scoped, tag = 'input window, operand 0, single buffered']
    #allocation3 [shape = 's32[1]{0}', space=sflag, size = 0x4, scoped, tag = 'scoped memory for tpu_custom_call.1']
    #allocation4 [shape = 's32[1]{0}', space=sflag, size = 0x4, scoped, tag = 'scoped memory for tpu_custom_call.1']
    #allocation5 [shape = 'u8[16384]{0}', space=vmem, size = 0x4000, scoped, tag = 'input window, operand 1, single buffered']
    #allocation6 [shape = 's32[1]{0}', space=sflag, size = 0x4, scoped, tag = 'scoped memory for tpu_custom_call.1']
    #allocation7 [shape = 'u8[16384]{0}', space=vmem, size = 0x4000, scoped, tag = 'output window, operand 0, single buffered']
    %7 = vsyncpa [#allocation3], 0
    %8 = vsyncpa [#allocation6], 0
    %9 = vsyncpa [#allocation4], 0
    // Predicated region
    $region2: #{tpu_custom_call.1} parent=1 // pred_check
      _
    $region3: #{tpu_custom_call.1} parent=1 // pred_check_branch
      %11 = sbr.rel (0) target = $region5
    $region4: #{tpu_custom_call.1} parent=1 // pred_region
      %s13 = ssub.s32 1536, 1536
      %14 = vsyncadd [#allocation3], %s13
      %s15 = sshll.u32 [#allocation2], 4
      %s16 = int_to_ptr.vmem [resolvable:$true] %s15
      %21 = dma.hbm_to_vmem [thread:$0]  %s0, 1536, %s16, [#allocation3], 512, 512, 32
    $region5: #{tpu_custom_call.1} parent=1 // pred_fallthru
      _
    // Predicated region
    $region6: #{tpu_custom_call.1} parent=1 // pred_check
      _
    $region7: #{tpu_custom_call.1} parent=1 // pred_check_branch
      %23 = sbr.rel (0) target = $region9
    $region8: #{tpu_custom_call.1} parent=1 // pred_region
      %s25 = ssub.s32 512, 512
      %26 = vsyncadd [#allocation6], %s25
      %s28 = sshll.u32 [#allocation5], 4
      %s29 = int_to_ptr.vmem [resolvable:$true] %s28
      %31 = dma.hbm_to_vmem [thread:$0]  %s1, 512, %s29, [#allocation6]
    $region9: #{tpu_custom_call.1} parent=1 // pred_fallthru
      _
    // Predicated region
    $region10: #{tpu_custom_call.1} parent=1 // pred_check
      _
    $region11: #{tpu_custom_call.1} parent=1 // pred_check_branch
      %33 = sbr.rel (0) target = $region13
    $region12: #{tpu_custom_call.1} parent=1 // pred_region
      %34 = dma.done [#allocation3], 1536
    $region13: #{tpu_custom_call.1} parent=1 // pred_fallthru
      _
    // Predicated region
    $region14: #{tpu_custom_call.1} parent=1 // pred_check
      _
    $region15: #{tpu_custom_call.1} parent=1 // pred_check_branch
      %36 = sbr.rel (0) target = $region17
    $region16: #{tpu_custom_call.1} parent=1 // pred_region
      %37 = dma.done [#allocation6], 512
    $region17: #{tpu_custom_call.1} parent=1 // pred_fallthru
      _
    %v38 = vld [vmem:[#allocation2] sm:$0xff]
    %v39 = vld [vmem:[#allocation2 + $0x8] sm:$0xff]
    %v40 = vld [vmem:[#allocation2 + $0x10] sm:$0xff]
    %v41 = vld [vmem:[#allocation2 + $0x18] sm:$0xff]
    %s42 = scalar_lea.vmem [#allocation2], 32
    %v43 = vld [vmem:[%s42] sm:$0xff]
    %v44 = vld [vmem:[%s42 + $0x8] sm:$0xff]
    %v45 = vld [vmem:[%s42 + $0x10] sm:$0xff]
    %v46 = vld [vmem:[%s42 + $0x18] sm:$0xff]
    %s47 = scalar_lea.vmem [#allocation2], 64
    %v48 = vld [vmem:[%s47] sm:$0xff]
    %v49 = vld [vmem:[%s47 + $0x8] sm:$0xff]
    %v50 = vld [vmem:[%s47 + $0x10] sm:$0xff]
    %v51 = vld [vmem:[%s47 + $0x18] sm:$0xff]
    %v52 = vmul.f32 %v38, 0.70710677
    %v53 = vmul.f32 %v39, 0.70710677
    %v54 = vmul.f32 %v40, 0.70710677
    %v55 = vmul.f32 %v41, 0.70710677
    %v56 = vmul.f32 %v43, 0.70710677
    %v57 = vmul.f32 %v44, 0.70710677
    %v58 = vmul.f32 %v45, 0.70710677
    %v59 = vmul.f32 %v46, 0.70710677
    %v60 = vadd.f32 %v52, %v56
    %v61 = vadd.f32 %v53, %v57
    %v62 = vadd.f32 %v54, %v58
    %v63 = vadd.f32 %v55, %v59
    %v64 = vmul.f32 %v48, 0.0
    %v65 = vmul.f32 %v49, 0.0
    %v66 = vmul.f32 %v50, 0.0
    %v67 = vmul.f32 %v51, 0.0
    %v68 = vadd.f32 %v60, %v64
    %v69 = vadd.f32 %v61, %v65
    %v70 = vadd.f32 %v62, %v66
    %v71 = vadd.f32 %v63, %v67
    %v72 = vmul.f32 %v68, %v68
    %v73 = vmul.f32 %v69, %v69
    %v74 = vmul.f32 %v70, %v70
    %v75 = vmul.f32 %v71, %v71
    %v76 = vmul.f32 %v72, %v72
    %v77 = vmul.f32 %v73, %v73
    %v78 = vmul.f32 %v74, %v74
    %v79 = vmul.f32 %v75, %v75
    %v80 = vmul.f32 %v38, -0.70710677
    %v81 = vmul.f32 %v39, -0.70710677
    %v82 = vmul.f32 %v40, -0.70710677
    %v83 = vmul.f32 %v41, -0.70710677
    %v84 = vadd.f32 %v80, %v56
    %v85 = vadd.f32 %v81, %v57
    %v86 = vadd.f32 %v82, %v58
    %v87 = vadd.f32 %v83, %v59
    %v88 = vadd.f32 %v84, %v64
    %v89 = vadd.f32 %v85, %v65
    %v90 = vadd.f32 %v86, %v66
    %v91 = vadd.f32 %v87, %v67
    %v92 = vmul.f32 %v88, %v88
    %v93 = vmul.f32 %v89, %v89
    %v94 = vmul.f32 %v90, %v90
    %v95 = vmul.f32 %v91, %v91
    %v96 = vmul.f32 %v92, %v92
    %v97 = vmul.f32 %v93, %v93
    %v98 = vmul.f32 %v94, %v94
    %v99 = vmul.f32 %v95, %v95
    %v100 = vadd.f32 %v76, %v96
    %v101 = vadd.f32 %v77, %v97
    %v102 = vadd.f32 %v78, %v98
    %v103 = vadd.f32 %v79, %v99
    %v104 = vmul.f32 %v38, 0.0
    %v105 = vmul.f32 %v39, 0.0
    %v106 = vmul.f32 %v40, 0.0
    %v107 = vmul.f32 %v41, 0.0
    %v108 = vmul.f32 %v43, -0.0
    %v109 = vmul.f32 %v44, -0.0
    %v110 = vmul.f32 %v45, -0.0
    %v111 = vmul.f32 %v46, -0.0
    %v112 = vadd.f32 %v104, %v108
    %v113 = vadd.f32 %v105, %v109
    %v114 = vadd.f32 %v106, %v110
    %v115 = vadd.f32 %v107, %v111
    %v116 = vadd.f32 %v112, %v48
    %v117 = vadd.f32 %v113, %v49
    %v118 = vadd.f32 %v114, %v50
    %v119 = vadd.f32 %v115, %v51
    %v120 = vmul.f32 %v116, %v116
    %v121 = vmul.f32 %v117, %v117
    %v122 = vmul.f32 %v118, %v118
    %v123 = vmul.f32 %v119, %v119
    %v124 = vmul.f32 %v120, %v120
    %v125 = vmul.f32 %v121, %v121
    %v126 = vmul.f32 %v122, %v122
    %v127 = vmul.f32 %v123, %v123
    %v128 = vadd.f32 %v100, %v124
    %v129 = vadd.f32 %v101, %v125
    %v130 = vadd.f32 %v102, %v126
    %v131 = vadd.f32 %v103, %v127
    %v132 = vmul.f32 %v128, -10000.0
    %v133 = vmul.f32 %v129, -10000.0
    %v134 = vmul.f32 %v130, -10000.0
    %v135 = vmul.f32 %v131, -10000.0
    %v136 = vld [vmem:[#allocation5] sm:$0xff]
    %v137 = vld [vmem:[#allocation5 + $0x8] sm:$0xff]
    %v138 = vld [vmem:[#allocation5 + $0x10] sm:$0xff]
    %v139 = vld [vmem:[#allocation5 + $0x18] sm:$0xff]
    %v140 = vmul.f32 %v132, %v136
    %v141 = vmul.f32 %v133, %v137
    %v142 = vmul.f32 %v134, %v138
    %v143 = vmul.f32 %v135, %v139
    %144 = vst [vmem:[#allocation7] sm:$0xff] %v140
    %145 = vst [vmem:[#allocation7 + $0x8] sm:$0xff] %v141
    %146 = vst [vmem:[#allocation7 + $0x10] sm:$0xff] %v142
    %147 = vst [vmem:[#allocation7 + $0x18] sm:$0xff] %v143
    // Predicated region
    $region18: #{tpu_custom_call.1} parent=1 // pred_check
      _
    $region19: #{tpu_custom_call.1} parent=1 // pred_check_branch
      %149 = sbr.rel (0) target = $region21
    $region20: #{tpu_custom_call.1} parent=1 // pred_region
      %s151 = ssub.s32 512, 512
      %152 = vsyncadd [#allocation4], %s151
      %s154 = sshll.u32 [#allocation7], 4
      %s155 = int_to_ptr.vmem [resolvable:$true] %s154
      %157 = dma.vmem_to_hbm [thread:$0]  %s155, 512, %s2, [#allocation4]
    $region21: #{tpu_custom_call.1} parent=1 // pred_fallthru
      _
    // Predicated region
    $region22: #{tpu_custom_call.1} parent=1 // pred_check
      _
    $region23: #{tpu_custom_call.1} parent=1 // pred_check_branch
      %159 = sbr.rel (0) target = $region25
    $region24: #{tpu_custom_call.1} parent=1 // pred_region
      %160 = dma.done [#allocation4], 512
    $region25: #{tpu_custom_call.1} parent=1 // pred_fallthru
      _
    %161 = vsyncpa [#allocation3], 1
    %162 = vsyncpa [#allocation6], 1
    %163 = vsyncpa [#allocation4], 1

</llo_original>
